<compile_context>
chip_gen: v7x
topology: tpu7x:2x2x1
jax: 0.10.0
libtpu: 0.0.40
codegen_flags: <defaults>
</compile_context>

<pallas_src>
import functools
import math

import jax
import jax.numpy as jnp
from jax.experimental import pallas as pl
from jax.experimental.pallas import tpu as pltpu


# ---------------------------------------------------------------------------
# Parameter setup (glue, plain JAX): sinusoidal positional-encoding table.
# ---------------------------------------------------------------------------
def make_sinusoidal_pe(max_len: int, d_model: int) -> jnp.ndarray:
    position = jnp.arange(max_len, dtype=jnp.float32)[:, None]            # (L, 1)
    div_term = jnp.exp(
        jnp.arange(0, d_model, 2, dtype=jnp.float32)
        * (-math.log(10000.0) / d_model)
    )                                                                      # (D/2,)
    angles = position * div_term                                           # (L, D/2)
    pe = jnp.zeros((max_len, d_model), dtype=jnp.float32)
    pe = pe.at[:, 0::2].set(jnp.sin(angles))
    pe = pe.at[:, 1::2].set(jnp.cos(angles))
    return pe                                                              # (L, D)


# ---------------------------------------------------------------------------
# Kernels (operate on lane-dense 2D blocks)
# ---------------------------------------------------------------------------
def _pe_add_kernel(x_ref, pe_ref, o_ref):
    # x_ref: (TB, TC), pe_ref: (1, TC) -> sublane-broadcast add.
    o_ref[...] = x_ref[...] + pe_ref[...]


def _pe_add_dropout_kernel(x_ref, pe_ref, bits_ref, o_ref, *, keep_threshold, scale):
    y = x_ref[...] + pe_ref[...]                                           # (TB, TC)
    # Integer threshold compare on the top 24 bits: P(keep) = 1 - p.
    keep = (bits_ref[...] >> 8) >= jnp.uint32(keep_threshold)
    o_ref[...] = jnp.where(keep, y * scale, jnp.zeros_like(y)).astype(o_ref.dtype)


# ---------------------------------------------------------------------------
# Wrapper
# ---------------------------------------------------------------------------
def _pick_tile(dim: int, quantum: int, target: int) -> int:
    """Largest tile <= target that is a multiple of `quantum` and evenly divides
    `dim`; falls back to the full dim (always a legal block shape)."""
    if dim <= target:
        return dim
    t = (target // quantum) * quantum
    while t >= quantum:
        if dim % t == 0:
            return t
        t -= quantum
    return dim


_ROW_TILE_TARGET = 8          # sublane quantum
_LANE_TILE_TARGET = 32 * 1024  # -> ~1 MiB f32 blocks with 8 rows


def positional_encoding_forward(x, pe_table, *, p=0.1, training=False, rng_key=None):
    """x: (B, S, D). pe_table: (max_len, D). Returns (B, S, D)."""
    B, S, D = x.shape
    C = S * D

    # Lane-dense flattening (no data movement: contiguous reshape).
    x2 = x.reshape(B, C)
    pe2 = pe_table[:S, :].astype(x.dtype).reshape(1, C)

    TB = _pick_tile(B, 8, _ROW_TILE_TARGET)
    TC = _pick_tile(C, 128, _LANE_TILE_TARGET)
    grid = (B // TB, C // TC)

    x_spec = pl.BlockSpec((TB, TC), lambda i, j: (i, j))
    pe_spec = pl.BlockSpec((1, TC), lambda i, j: (0, j))
    bits_spec = pl.BlockSpec((TB, TC), lambda i, j: (i, j))
    o_spec = pl.BlockSpec((TB, TC), lambda i, j: (i, j))
    out_shape = jax.ShapeDtypeStruct((B, C), x.dtype)

    itemsize = jnp.dtype(x.dtype).itemsize
    cparams = pltpu.CompilerParams(
        dimension_semantics=("parallel", "parallel"),
        vmem_limit_bytes=48 * 1024 * 1024,
    )

    if (not training) or p == 0.0:
        out2 = pl.pallas_call(
            _pe_add_kernel,
            out_shape=out_shape,
            grid=grid,
            in_specs=[x_spec, pe_spec],
            out_specs=o_spec,
            compiler_params=cparams,
            cost_estimate=pl.CostEstimate(
                flops=B * C,
                transcendentals=0,
                bytes_accessed=(2 * B * C + C) * itemsize,
            ),
        )(x2, pe2)
        return out2.reshape(B, S, D)

    if p >= 1.0:
        return jnp.zeros_like(x)

    if rng_key is None:
        rng_key = jax.random.PRNGKey(0)
    # Random bits generated once in plain JAX (portable: works compiled on TPU
    # and under the Pallas interpreter); mask + scale happen inside the kernel.
    bits = jax.random.bits(rng_key, (B, C), dtype=jnp.uint32)
    keep_threshold = int(round(p * (1 << 24)))
    scale = 1.0 / (1.0 - p)

    out2 = pl.pallas_call(
        functools.partial(
            _pe_add_dropout_kernel, keep_threshold=keep_threshold, scale=scale
        ),
        out_shape=out_shape,
        grid=grid,
        in_specs=[x_spec, pe_spec, bits_spec],
        out_specs=o_spec,
        compiler_params=cparams,
        cost_estimate=pl.CostEstimate(
            flops=3 * B * C,
            transcendentals=0,
            bytes_accessed=(3 * B * C + C) * itemsize,
        ),
    )(x2, pe2, bits)
    return out2.reshape(B, S, D)


# ---------------------------------------------------------------------------
# Demo / self-check
# ---------------------------------------------------------------------------
if __name__ == "__main__":
    B, S, D = 2, 8, 32
    MAX_LEN = 64
    P_DROP = 0.1

    key = jax.random.PRNGKey(0)
    kx, kdrop = jax.random.split(key)
    x = jax.random.normal(kx, (B, S, D), dtype=jnp.float32)
    pe_table = make_sinusoidal_pe(MAX_LEN, D)
    ref = x + pe_table[None, :S, :]

    # Eval mode (dropout is identity): check against pure-JAX reference.
    out_eval = positional_encoding_forward(x, pe_table, p=P_DROP, training=False)
    out_eval = jax.block_until_ready(out_eval)
    assert out_eval.shape == (B, S, D)
    assert jnp.allclose(out_eval, ref, atol=1e-6), "eval-mode mismatch"

    # Training mode: inverted dropout. Reconstruct the exact expected output
    # from the same random bits / threshold used by the wrapper.
    out_train = positional_encoding_forward(
        x, pe_table, p=P_DROP, training=True, rng_key=kdrop
    )
    out_train = jax.block_until_ready(out_train)
    assert out_train.shape == (B, S, D)

    bits_ref = jax.random.bits(kdrop, (B, S * D), dtype=jnp.uint32)
    thr = jnp.uint32(int(round(P_DROP * (1 << 24))))
    keep_ref = ((bits_ref >> 8) >= thr).reshape(B, S, D)
    expected = jnp.where(keep_ref, ref * (1.0 / (1.0 - P_DROP)), 0.0)
    assert jnp.allclose(out_train, expected, atol=1e-5), "training-mode mismatch"

    print("KERNEL_OK")
</pallas_src>

<mosaic_0001>
module attributes {stable_mosaic.version = 11 : i64} {
  func.func @_pe_add_kernel(%arg0: i32, %arg1: i32, %arg2: memref<2x256xf32, #tpu.memory_space<vmem>>, %arg3: memref<1x256xf32, #tpu.memory_space<vmem>>, %arg4: memref<2x256xf32, #tpu.memory_space<vmem>>) attributes {dimension_semantics = [#tpu.dimension_semantics<parallel>, #tpu.dimension_semantics<parallel>], iteration_bounds = array<i64: 1, 1>, scalar_prefetch = 0 : i64, scratch_operands = 0 : i64, tpu.core_type = #tpu.core_type<tc>, window_params = [{transform_indices = @transform_0, window_bounds = array<i64: 2, 256>}, {transform_indices = @transform_1, window_bounds = array<i64: 1, 256>}, {transform_indices = @transform_2, window_bounds = array<i64: 2, 256>}]} {
    %c0 = arith.constant 0 : index
    %c0_0 = arith.constant 0 : index
    %0 = vector.load %arg2[%c0, %c0_0] : memref<2x256xf32, #tpu.memory_space<vmem>>, vector<2x256xf32>
    %c0_1 = arith.constant 0 : index
    %c0_2 = arith.constant 0 : index
    %1 = vector.load %arg3[%c0_1, %c0_2] : memref<1x256xf32, #tpu.memory_space<vmem>>, vector<1x256xf32>
    %2 = vector.broadcast %1 : vector<1x256xf32> to vector<2x256xf32>
    %3 = arith.addf %0, %2 : vector<2x256xf32>
    %c0_3 = arith.constant 0 : index
    %c0_4 = arith.constant 0 : index
    %4 = vector.load %arg4[%c0_3, %c0_4] : memref<2x256xf32, #tpu.memory_space<vmem>>, vector<2x256xf32>
    tpu.vector_store %arg4[%c0_3, %c0_4], %3 {strides = array<i32>} : memref<2x256xf32, #tpu.memory_space<vmem>>, vector<2x256xf32>,
    return
  }
  func.func @transform_0(%arg0: i32, %arg1: i32) -> (i32, i32) {
    %c0_i32 = arith.constant 0 : i32
    return %arg0, %arg1 : i32, i32
  }
  func.func @transform_1(%arg0: i32, %arg1: i32) -> (i32, i32) {
    %c0_i32 = arith.constant 0 : i32
    %c0_i32_0 = arith.constant 0 : i32
    return %c0_i32, %arg1 : i32, i32
  }
  func.func @transform_2(%arg0: i32, %arg1: i32) -> (i32, i32) {
    %c0_i32 = arith.constant 0 : i32
    return %arg0, %arg1 : i32, i32
  }
}

</mosaic_0001>

<llo_original>
// kernel: tpu_custom_call.1
$region0: #{tpu_custom_call.1}
  #allocation0 [shape = 'u32[]', space=smem, size = 0x4, offset = 0x4, fixed_abs, tag = 'smem constant byte address 0x4 - core index']
  #allocation1 [shape = 'u32[144,128]{1,0:T(1,128)}', space=vmem, size = 0x12000, scoped, tag = 'internal scratch']
  %s0 = inlined_call_operand.hbm [shape: f32[2,256], index: 0, kind: input, shape index: {}]
  %s1 = inlined_call_operand.vmem [shape: f32[1,256], index: 1, kind: input, shape index: {}]
  %s2 = inlined_call_operand.hbm [shape: f32[2,256], index: 2, kind: output, shape index: {}]
  %s3 = sld [smem:[#allocation0]]
  $region22: #{tpu_custom_call.1} parent=0
    _
  %s5 = ssub.s32 1, %s3
  %s6 = scalar_select 0, %s5, %s3
  $region1: #{tpu_custom_call.1} parent=0
    #allocation2 [shape = 'u8[2048]{0}', space=vmem, size = 0x800, scoped, tag = 'input window, operand 0, single buffered']
    #allocation3 [shape = 's32[1]{0}', space=sflag, size = 0x4, scoped, tag = 'scoped memory for tpu_custom_call.1']
    #allocation4 [shape = 's32[1]{0}', space=sflag, size = 0x4, scoped, tag = 'scoped memory for tpu_custom_call.1']
    #allocation5 [shape = 'u8[2048]{0}', space=vmem, size = 0x800, scoped, tag = 'output window, operand 0, single buffered']
    %7 = vsyncpa [#allocation3], 0
    %8 = vsyncpa [#allocation4], 0
    // Predicated region
    $region2: #{tpu_custom_call.1} parent=1 // pred_check
      _
    $region3: #{tpu_custom_call.1} parent=1 // pred_check_branch
      %10 = sbr.rel (0) target = $region5
    $region4: #{tpu_custom_call.1} parent=1 // pred_region
      %s12 = ssub.s32 64, 64
      %13 = vsyncadd [#allocation3], %s12
      %s15 = sshll.u32 [#allocation2], 4
      %s16 = int_to_ptr.vmem [resolvable:$true] %s15
      %18 = dma.hbm_to_vmem [thread:$0]  %s0, 64, %s16, [#allocation3]
    $region5: #{tpu_custom_call.1} parent=1 // pred_fallthru
      _
    // Predicated region
    $region6: #{tpu_custom_call.1} parent=1 // pred_check
      _
    $region7: #{tpu_custom_call.1} parent=1 // pred_check_branch
      %20 = sbr.rel (0) target = $region9
    $region8: #{tpu_custom_call.1} parent=1 // pred_region
      _
    $region9: #{tpu_custom_call.1} parent=1 // pred_fallthru
      _
    // Predicated region
    $region10: #{tpu_custom_call.1} parent=1 // pred_check
      _
    $region11: #{tpu_custom_call.1} parent=1 // pred_check_branch
      %22 = sbr.rel (0) target = $region13
    $region12: #{tpu_custom_call.1} parent=1 // pred_region
      %23 = dma.done [#allocation3], 64
    $region13: #{tpu_custom_call.1} parent=1 // pred_fallthru
      _
    %v24 = vld [vmem:[#allocation2] sm:$0xf]
    %v25 = vld [vmem:[%s1] sm:$0x3]
    %v27 = vlaneseq
    %v28 = vshrl.u32 %v27, 7
    %v29 = vsub.s32 0, %v28
    %v30 = vrot.slane %v25, %v29
    %v31 = vlaneseq
    %v32 = vshrl.u32 %v31, 7
    %v33 = vsub.s32 1, %v32
    %v34 = vrot.slane %v25, %v33
    %v35 = vcombine.low %v30, %v34
    %v37 = vunpack.c.l.s4 1983009808
    %v38 = vunpack.c.0.s8 %v37
    %v39 = vlaneseq
    %v40 = vshrl.u32 %v39, 7
    %v41 = vsub.s32 %v38, %v40
    %v42 = vrot.slane %v35, %v41
    %v44 = vadd.f32 %v24, %v42
    %45 = vst [vmem:[#allocation5] sm:$0xf] %v44
    // Predicated region
    $region14: #{tpu_custom_call.1} parent=1 // pred_check
      _
    $region15: #{tpu_custom_call.1} parent=1 // pred_check_branch
      %47 = sbr.rel (0) target = $region17
    $region16: #{tpu_custom_call.1} parent=1 // pred_region
      %s49 = ssub.s32 64, 64
      %50 = vsyncadd [#allocation4], %s49
      %s52 = sshll.u32 [#allocation5], 4
      %s53 = int_to_ptr.vmem [resolvable:$true] %s52
      %55 = dma.vmem_to_hbm [thread:$0]  %s53, 64, %s2, [#allocation4]
    $region17: #{tpu_custom_call.1} parent=1 // pred_fallthru
      _
    // Predicated region
    $region18: #{tpu_custom_call.1} parent=1 // pred_check
      _
    $region19: #{tpu_custom_call.1} parent=1 // pred_check_branch
      %57 = sbr.rel (0) target = $region21
    $region20: #{tpu_custom_call.1} parent=1 // pred_region
      %58 = dma.done [#allocation4], 64
    $region21: #{tpu_custom_call.1} parent=1 // pred_fallthru
      _
    %59 = vsyncpa [#allocation3], 1
    %60 = vsyncpa [#allocation4], 1

</llo_original>
